<compile_context>
chip_gen: v7x
topology: tpu7x:2x2x1
jax: 0.10.0
libtpu: 0.0.40
codegen_flags: <defaults>
</compile_context>

<pallas_src>
import jax
import jax.numpy as jnp
from jax.experimental import pallas as pl
from jax.experimental.pallas import tpu as pltpu

LANES = 128  # pad all feature dims to one full vreg lane width


# ------------------------- Pallas kernel -------------------------------------

def _fused_gnn_kernel(a0_ref, a1_ref, x_ref, w0_ref, b0_ref, w1_ref, b1_ref,
                      w2_ref, b2_ref, o_ref):
    """Whole 2-layer SAGEConv + Linear + relu forward, resident in VMEM."""
    nt0 = a0_ref.shape[0]
    nt1 = a1_ref.shape[0]

    # ---- layer 0: mean aggregation + fused [lin_l | lin_r] projection + relu
    x = x_ref[...]                                                  # (ns0, 128) bf16
    agg0 = jnp.dot(a0_ref[...], x, preferred_element_type=jnp.float32)
    cat0 = jnp.concatenate([agg0.astype(jnp.bfloat16), x[:nt0, :]], axis=-1)
    h0 = jnp.dot(cat0, w0_ref[...], preferred_element_type=jnp.float32)
    h0 = jnp.maximum(h0 + b0_ref[...], 0.0)        # relu (+ dropout p=0 -> no-op)
    h0b = h0.astype(jnp.bfloat16)

    # ---- layer 1: same, no relu after the last conv
    agg1 = jnp.dot(a1_ref[...], h0b, preferred_element_type=jnp.float32)
    cat1 = jnp.concatenate([agg1.astype(jnp.bfloat16), h0b[:nt1, :]], axis=-1)
    h1 = jnp.dot(cat1, w1_ref[...], preferred_element_type=jnp.float32)
    h1b = (h1 + b1_ref[...]).astype(jnp.bfloat16)

    # ---- final Linear(hidden, 1), lane-padded to 128 output lanes, + relu
    out = jnp.dot(h1b, w2_ref[...], preferred_element_type=jnp.float32)
    o_ref[...] = jnp.maximum(out + b2_ref[...], 0.0)


# ------------------------- wrappers -------------------------------------------

def _vmem():
    return pl.BlockSpec(memory_space=pltpu.MemorySpace.VMEM)


def fused_forward(a0, a1, x_pad, w0, b0, w1, b1, w2, b2):
    nt1 = a1.shape[0]
    return pl.pallas_call(
        _fused_gnn_kernel,
        out_shape=jax.ShapeDtypeStruct((nt1, LANES), jnp.float32),
        in_specs=[_vmem()] * 9,
        out_specs=_vmem(),
    )(a0, a1, x_pad, w0, b0, w1, b1, w2, b2)


def _pad_cols(a, width):
    return jnp.pad(a, ((0, 0), (0, width - a.shape[1])))


def _pad_rows(a, height):
    return jnp.pad(a, ((0, height - a.shape[0]), (0, 0)))


def build_mean_adjacency(edge_index, num_targets, num_sources):
    """Dense row-normalized adjacency for mean aggregation (plain-JAX glue)."""
    src, dst = edge_index[0], edge_index[1]
    a = jnp.zeros((num_targets, num_sources), jnp.float32)
    a = a.at[dst, src].add(1.0)
    deg = a.sum(axis=1, keepdims=True)
    return jnp.where(deg > 0, a / jnp.maximum(deg, 1.0), 0.0)


def prepare_params(params):
    """Stack lin_l/lin_r, zero-pad feature dims to 128 lanes, cast to bf16."""
    convs = []
    for wl, bl, wr in params["convs"]:
        wl_p = _pad_cols(_pad_rows(wl, LANES), LANES)               # (128, 128)
        wr_p = _pad_cols(_pad_rows(wr, LANES), LANES)               # (128, 128)
        w_cat = jnp.concatenate([wl_p, wr_p], axis=0).astype(jnp.bfloat16)  # (256,128)
        b_p = _pad_cols(bl, LANES).astype(jnp.float32)              # (1, 128)
        convs.append((w_cat, b_p))
    w_fin, b_fin = params["linear"]
    w_fin_p = _pad_cols(_pad_rows(w_fin, LANES), LANES).astype(jnp.bfloat16)
    b_fin_p = _pad_cols(b_fin, LANES).astype(jnp.float32)
    return convs, (w_fin_p, b_fin_p)


def model_forward(x, adjs, params):
    """Mirrors Model.forward for layer_name='SAGEConv', num_layers=2."""
    # TODO(synk): at realistic neighbor-sampler sizes, replace the dense
    # scatter-built adjacency + matmul aggregation with scalar-prefetched edge
    # lists and an in-kernel segment-sum (PrefetchScalarGridSpec), and tile the
    # Ns reduction axis over a grid (blocks sized for v7x's 64 MiB VMEM, Nt
    # axis 'parallel' for the 2 TensorCores). The dense (Nt, Ns) matrix is the
    # part that does not scale.
    (ei0, _e0, (ns0, nt0)), (ei1, _e1, (ns1, nt1)) = adjs
    a0 = build_mean_adjacency(ei0, nt0, ns0).astype(jnp.bfloat16)
    a1 = build_mean_adjacency(ei1, nt1, ns1).astype(jnp.bfloat16)

    convs, (w_fin, b_fin) = prepare_params(params)
    (w0, b0), (w1, b1) = convs

    x_pad = _pad_cols(x, LANES).astype(jnp.bfloat16)
    out_dim = params["linear"][0].shape[1]

    out = fused_forward(a0, a1, x_pad, w0, b0, w1, b1, w_fin, b_fin)
    return out[:, :out_dim]


# ------------------------- plain-JAX reference --------------------------------

def ref_forward(x, adjs, params):
    """Same math (incl. bf16 matmul inputs / f32 accumulation), no padding."""
    bf = jnp.bfloat16
    num_convs = len(params["convs"])
    h = x.astype(bf)
    for i, (ei, _e, (ns, nt)) in enumerate(adjs):
        a = build_mean_adjacency(ei, nt, ns).astype(bf)
        wl, bl, wr = params["convs"][i]
        agg = jnp.dot(a, h, preferred_element_type=jnp.float32).astype(bf)
        out = (jnp.dot(agg, wl.astype(bf), preferred_element_type=jnp.float32)
               + jnp.dot(h[:nt], wr.astype(bf), preferred_element_type=jnp.float32)
               + bl)
        if i < num_convs - 1:
            out = jnp.maximum(out, 0.0)
        h = out.astype(bf)
    w, b = params["linear"]
    out = jnp.dot(h, w.astype(bf), preferred_element_type=jnp.float32) + b
    return jnp.maximum(out, 0.0)


# ------------------------- main ------------------------------------------------

if __name__ == "__main__":
    key = jax.random.PRNGKey(0)

    input_dim, hidden_dim, output_dim = 16, 50, 1   # hidden_dim/output_dim per spec
    n0, n1, n2 = 64, 32, 16        # node counts: sources / layer0 targets / layer1 targets
    e0, e1 = 256, 128              # sampled edges per layer

    keys = jax.random.split(key, 9)

    # node features (target nodes are the first rows, NeighborSampler convention)
    x = jax.random.normal(keys[0], (n0, input_dim), jnp.float32)

    # bipartite sampled edges: edge_index[0]=source idx, edge_index[1]=target idx
    ei0 = jnp.stack([
        jax.random.randint(keys[1], (e0,), 0, n0),
        jax.random.randint(keys[2], (e0,), 0, n1),
    ])
    ei1 = jnp.stack([
        jax.random.randint(keys[3], (e1,), 0, n1),
        jax.random.randint(keys[4], (e1,), 0, n2),
    ])
    adjs = [(ei0, None, (n0, n1)), (ei1, None, (n1, n2))]

    # SAGEConv params: lin_l has bias, lin_r has no bias
    def init_conv(k, din, dout):
        k1, k2, k3 = jax.random.split(k, 3)
        s = 1.0 / jnp.sqrt(din)
        wl = jax.random.uniform(k1, (din, dout), jnp.float32, -s, s)
        bl = jax.random.uniform(k2, (1, dout), jnp.float32, -s, s)
        wr = jax.random.uniform(k3, (din, dout), jnp.float32, -s, s)
        return wl, bl, wr

    s_fin = 1.0 / jnp.sqrt(hidden_dim)
    params = {
        "convs": [
            init_conv(keys[5], input_dim, hidden_dim),
            init_conv(keys[6], hidden_dim, hidden_dim),
        ],
        "linear": (
            jax.random.uniform(keys[7], (hidden_dim, output_dim), jnp.float32,
                               -s_fin, s_fin),
            jax.random.uniform(keys[8], (1, output_dim), jnp.float32,
                               -s_fin, s_fin),
        ),
    }

    out = model_forward(x, adjs, params)
    out = jax.block_until_ready(out)
    assert out.shape == (n2, output_dim)

    ref = ref_forward(x, adjs, params)
    assert jnp.allclose(out, ref.astype(jnp.float32), atol=2e-2, rtol=2e-2), (
        float(jnp.max(jnp.abs(out - ref.astype(jnp.float32)))))

    print("KERNEL_OK")
</pallas_src>

<mosaic_0001>
module attributes {stable_mosaic.version = 11 : i64} {
  func.func @_fused_gnn_kernel(%arg0: memref<32x64xbf16, #tpu.memory_space<vmem>>, %arg1: memref<16x32xbf16, #tpu.memory_space<vmem>>, %arg2: memref<64x128xbf16, #tpu.memory_space<vmem>>, %arg3: memref<256x128xbf16, #tpu.memory_space<vmem>>, %arg4: memref<1x128xf32, #tpu.memory_space<vmem>>, %arg5: memref<256x128xbf16, #tpu.memory_space<vmem>>, %arg6: memref<1x128xf32, #tpu.memory_space<vmem>>, %arg7: memref<128x128xbf16, #tpu.memory_space<vmem>>, %arg8: memref<1x128xf32, #tpu.memory_space<vmem>>, %arg9: memref<16x128xf32, #tpu.memory_space<vmem>>) attributes {dimension_semantics = [], scalar_prefetch = 0 : i64, scratch_operands = 0 : i64, tpu.core_type = #tpu.core_type<tc>} {
    %c0 = arith.constant 0 : index
    %c0_0 = arith.constant 0 : index
    %0 = vector.load %arg2[%c0, %c0_0] : memref<64x128xbf16, #tpu.memory_space<vmem>>, vector<64x128xbf16>
    %c0_1 = arith.constant 0 : index
    %c0_2 = arith.constant 0 : index
    %1 = vector.load %arg0[%c0_1, %c0_2] : memref<32x64xbf16, #tpu.memory_space<vmem>>, vector<32x64xbf16>
    %cst = arith.constant dense<0.000000e+00> : vector<32x128xf32>
    %2 = tpu.matmul %1, %0, %cst {dimension_numbers = #tpu.dot_dimension_numbers<[1], [0], [0], [1], [0, 0, 1, 1], [], []>} : vector<32x64xbf16>, vector<64x128xbf16>, vector<32x128xf32> -> vector<32x128xf32>
    %3 = arith.truncf %2 : vector<32x128xf32> to vector<32x128xbf16>
    %4 = vector.extract_strided_slice %0 {offsets = [0, 0], sizes = [32, 128], strides = [1, 1]} : vector<64x128xbf16> to vector<32x128xbf16>
    %5 = tpu.concatenate %3, %4 in 1 : vector<32x128xbf16>, vector<32x128xbf16> -> vector<32x256xbf16>
    %c0_3 = arith.constant 0 : index
    %c0_4 = arith.constant 0 : index
    %6 = vector.load %arg3[%c0_3, %c0_4] : memref<256x128xbf16, #tpu.memory_space<vmem>>, vector<256x128xbf16>
    %cst_5 = arith.constant dense<0.000000e+00> : vector<32x128xf32>
    %7 = tpu.matmul %5, %6, %cst_5 {dimension_numbers = #tpu.dot_dimension_numbers<[1], [0], [0], [1], [0, 0, 1, 1], [], []>} : vector<32x256xbf16>, vector<256x128xbf16>, vector<32x128xf32> -> vector<32x128xf32>
    %c0_6 = arith.constant 0 : index
    %c0_7 = arith.constant 0 : index
    %8 = vector.load %arg4[%c0_6, %c0_7] : memref<1x128xf32, #tpu.memory_space<vmem>>, vector<1x128xf32>
    %9 = vector.broadcast %8 : vector<1x128xf32> to vector<32x128xf32>
    %10 = arith.addf %7, %9 : vector<32x128xf32>
    %cst_8 = arith.constant 0.000000e+00 : f32
    %11 = vector.broadcast %cst_8 : f32 to vector<32x128xf32>
    %12 = arith.maximumf %10, %11 : vector<32x128xf32>
    %13 = arith.truncf %12 : vector<32x128xf32> to vector<32x128xbf16>
    %c0_9 = arith.constant 0 : index
    %c0_10 = arith.constant 0 : index
    %14 = vector.load %arg1[%c0_9, %c0_10] : memref<16x32xbf16, #tpu.memory_space<vmem>>, vector<16x32xbf16>
    %cst_11 = arith.constant dense<0.000000e+00> : vector<16x128xf32>
    %15 = tpu.matmul %14, %13, %cst_11 {dimension_numbers = #tpu.dot_dimension_numbers<[1], [0], [0], [1], [0, 0, 1, 1], [], []>} : vector<16x32xbf16>, vector<32x128xbf16>, vector<16x128xf32> -> vector<16x128xf32>
    %16 = arith.truncf %15 : vector<16x128xf32> to vector<16x128xbf16>
    %17 = vector.extract_strided_slice %13 {offsets = [0, 0], sizes = [16, 128], strides = [1, 1]} : vector<32x128xbf16> to vector<16x128xbf16>
    %18 = tpu.concatenate %16, %17 in 1 : vector<16x128xbf16>, vector<16x128xbf16> -> vector<16x256xbf16>
    %c0_12 = arith.constant 0 : index
    %c0_13 = arith.constant 0 : index
    %19 = vector.load %arg5[%c0_12, %c0_13] : memref<256x128xbf16, #tpu.memory_space<vmem>>, vector<256x128xbf16>
    %cst_14 = arith.constant dense<0.000000e+00> : vector<16x128xf32>
    %20 = tpu.matmul %18, %19, %cst_14 {dimension_numbers = #tpu.dot_dimension_numbers<[1], [0], [0], [1], [0, 0, 1, 1], [], []>} : vector<16x256xbf16>, vector<256x128xbf16>, vector<16x128xf32> -> vector<16x128xf32>
    %c0_15 = arith.constant 0 : index
    %c0_16 = arith.constant 0 : index
    %21 = vector.load %arg6[%c0_15, %c0_16] : memref<1x128xf32, #tpu.memory_space<vmem>>, vector<1x128xf32>
    %22 = vector.broadcast %21 : vector<1x128xf32> to vector<16x128xf32>
    %23 = arith.addf %20, %22 : vector<16x128xf32>
    %24 = arith.truncf %23 : vector<16x128xf32> to vector<16x128xbf16>
    %c0_17 = arith.constant 0 : index
    %c0_18 = arith.constant 0 : index
    %25 = vector.load %arg7[%c0_17, %c0_18] : memref<128x128xbf16, #tpu.memory_space<vmem>>, vector<128x128xbf16>
    %cst_19 = arith.constant dense<0.000000e+00> : vector<16x128xf32>
    %26 = tpu.matmul %24, %25, %cst_19 {dimension_numbers = #tpu.dot_dimension_numbers<[1], [0], [0], [1], [0, 0, 1, 1], [], []>} : vector<16x128xbf16>, vector<128x128xbf16>, vector<16x128xf32> -> vector<16x128xf32>
    %c0_20 = arith.constant 0 : index
    %c0_21 = arith.constant 0 : index
    %27 = vector.load %arg8[%c0_20, %c0_21] : memref<1x128xf32, #tpu.memory_space<vmem>>, vector<1x128xf32>
    %28 = vector.broadcast %27 : vector<1x128xf32> to vector<16x128xf32>
    %29 = arith.addf %26, %28 : vector<16x128xf32>
    %cst_22 = arith.constant 0.000000e+00 : f32
    %30 = vector.broadcast %cst_22 : f32 to vector<16x128xf32>
    %31 = arith.maximumf %29, %30 : vector<16x128xf32>
    %c0_23 = arith.constant 0 : index
    %c0_24 = arith.constant 0 : index
    %32 = vector.load %arg9[%c0_23, %c0_24] : memref<16x128xf32, #tpu.memory_space<vmem>>, vector<16x128xf32>
    tpu.vector_store %arg9[%c0_23, %c0_24], %31 {strides = array<i32>} : memref<16x128xf32, #tpu.memory_space<vmem>>, vector<16x128xf32>,
    return
  }
}

</mosaic_0001>

<llo_original>
// kernel: tpu_custom_call.1
$region0: #{tpu_custom_call.1}
  #allocation0 [shape = 'u32[]', space=smem, size = 0x4, offset = 0x4, fixed_abs, tag = 'smem constant byte address 0x4 - core index']
  #allocation1 [shape = 'u32[144,128]{1,0:T(1,128)}', space=vmem, size = 0x12000, scoped, tag = 'internal scratch']
  %s0 = inlined_call_operand.hbm [shape: bf16[32,64], index: 0, kind: input, shape index: {}]
  %s1 = inlined_call_operand.hbm [shape: bf16[16,32], index: 1, kind: input, shape index: {}]
  %s2 = inlined_call_operand.hbm [shape: bf16[64,128], index: 2, kind: input, shape index: {}]
  %s3 = inlined_call_operand.hbm [shape: bf16[256,128], index: 3, kind: input, shape index: {}]
  %s4 = inlined_call_operand.vmem [shape: f32[1,128], index: 4, kind: input, shape index: {}]
  %s5 = inlined_call_operand.hbm [shape: bf16[256,128], index: 5, kind: input, shape index: {}]
  %s6 = inlined_call_operand.vmem [shape: f32[1,128], index: 6, kind: input, shape index: {}]
  %s7 = inlined_call_operand.hbm [shape: bf16[128,128], index: 7, kind: input, shape index: {}]
  %s8 = inlined_call_operand.vmem [shape: f32[1,128], index: 8, kind: input, shape index: {}]
  %s9 = inlined_call_operand.hbm [shape: f32[16,128], index: 9, kind: output, shape index: {}]
  %s10 = sld [smem:[#allocation0]]
  $region70: #{tpu_custom_call.1} parent=0
    _
  %s12 = ssub.s32 1, %s10
  %s13 = scalar_select 0, %s12, %s10
  $region1: #{tpu_custom_call.1} parent=0
    #allocation2 [shape = 'u8[8192]{0}', space=vmem, size = 0x2000, scoped, tag = 'input window, operand 0, single buffered']
    #allocation3 [shape = 's32[1]{0}', space=sflag, size = 0x4, scoped, tag = 'scoped memory for tpu_custom_call.1']
    #allocation4 [shape = 's32[1]{0}', space=sflag, size = 0x4, scoped, tag = 'scoped memory for tpu_custom_call.1']
    #allocation5 [shape = 'u8[4096]{0}', space=vmem, size = 0x1000, scoped, tag = 'input window, operand 1, single buffered']
    #allocation6 [shape = 's32[1]{0}', space=sflag, size = 0x4, scoped, tag = 'scoped memory for tpu_custom_call.1']
    #allocation7 [shape = 'u8[16384]{0}', space=vmem, size = 0x4000, scoped, tag = 'input window, operand 2, single buffered']
    #allocation8 [shape = 'u8[65536]{0}', space=vmem, size = 0x10000, scoped, tag = 'input window, operand 3, single buffered']
    #allocation9 [shape = 's32[1]{0}', space=sflag, size = 0x4, scoped, tag = 'scoped memory for tpu_custom_call.1']
    #allocation10 [shape = 'u8[65536]{0}', space=vmem, size = 0x10000, scoped, tag = 'input window, operand 5, single buffered']
    #allocation11 [shape = 'u8[32768]{0}', space=vmem, size = 0x8000, scoped, tag = 'input window, operand 7, single buffered']
    #allocation12 [shape = 's32[1]{0}', space=sflag, size = 0x4, scoped, tag = 'scoped memory for tpu_custom_call.1']
    #allocation13 [shape = 'u8[8192]{0}', space=vmem, size = 0x2000, scoped, tag = 'output window, operand 0, single buffered']
    %14 = vsyncpa [#allocation3], 0
    %15 = vsyncpa [#allocation6], 0
    %16 = vsyncpa [#allocation9], 0
    %17 = vsyncpa [#allocation12], 0
    %18 = vsyncpa [#allocation4], 0
    // Predicated region
    $region2: #{tpu_custom_call.1} parent=1 // pred_check
      _
    $region3: #{tpu_custom_call.1} parent=1 // pred_check_branch
      %20 = sbr.rel (0) target = $region5
    $region4: #{tpu_custom_call.1} parent=1 // pred_region
      %s22 = ssub.s32 256, 256
      %23 = vsyncadd [#allocation3], %s22
      %s24 = sshll.u32 [#allocation2], 4
      %s25 = int_to_ptr.vmem [resolvable:$true] %s24
      %30 = dma.hbm_to_vmem [thread:$0]  %s0, 256, %s25, [#allocation3], 64, 64, 4
    $region5: #{tpu_custom_call.1} parent=1 // pred_fallthru
      _
    // Predicated region
    $region6: #{tpu_custom_call.1} parent=1 // pred_check
      _
    $region7: #{tpu_custom_call.1} parent=1 // pred_check_branch
      %32 = sbr.rel (0) target = $region9
    $region8: #{tpu_custom_call.1} parent=1 // pred_region
      %s34 = ssub.s32 128, 128
      %35 = vsyncadd [#allocation6], %s34
      %s36 = sshll.u32 [#allocation5], 4
      %s37 = int_to_ptr.vmem [resolvable:$true] %s36
      %42 = dma.hbm_to_vmem [thread:$0]  %s1, 128, %s37, [#allocation6], 64, 64, 4
    $region9: #{tpu_custom_call.1} parent=1 // pred_fallthru
      _
    // Predicated region
    $region10: #{tpu_custom_call.1} parent=1 // pred_check
      _
    $region11: #{tpu_custom_call.1} parent=1 // pred_check_branch
      %44 = sbr.rel (0) target = $region13
    $region12: #{tpu_custom_call.1} parent=1 // pred_region
      %s46 = ssub.s32 512, 512
      %47 = vsyncadd [#allocation6], %s46
      %s48 = sshll.u32 [#allocation7], 4
      %s49 = int_to_ptr.vmem [resolvable:$true] %s48
      %54 = dma.hbm_to_vmem [thread:$0]  %s2, 512, %s49, [#allocation6], 64, 64, 4
    $region13: #{tpu_custom_call.1} parent=1 // pred_fallthru
      _
    // Predicated region
    $region14: #{tpu_custom_call.1} parent=1 // pred_check
      _
    $region15: #{tpu_custom_call.1} parent=1 // pred_check_branch
      %56 = sbr.rel (0) target = $region17
    $region16: #{tpu_custom_call.1} parent=1 // pred_region
      %s58 = ssub.s32 2048, 2048
      %59 = vsyncadd [#allocation9], %s58
      %s60 = sshll.u32 [#allocation8], 4
      %s61 = int_to_ptr.vmem [resolvable:$true] %s60
      %66 = dma.hbm_to_vmem [thread:$0]  %s3, 2048, %s61, [#allocation9], 64, 64, 4
    $region17: #{tpu_custom_call.1} parent=1 // pred_fallthru
      _
    // Predicated region
    $region18: #{tpu_custom_call.1} parent=1 // pred_check
      _
    $region19: #{tpu_custom_call.1} parent=1 // pred_check_branch
      %68 = sbr.rel (0) target = $region21
    $region20: #{tpu_custom_call.1} parent=1 // pred_region
      _
    $region21: #{tpu_custom_call.1} parent=1 // pred_fallthru
      _
    // Predicated region
    $region22: #{tpu_custom_call.1} parent=1 // pred_check
      _
    $region23: #{tpu_custom_call.1} parent=1 // pred_check_branch
      %70 = sbr.rel (0) target = $region25
    $region24: #{tpu_custom_call.1} parent=1 // pred_region
      %s72 = ssub.s32 2048, 2048
      %73 = vsyncadd [#allocation9], %s72
      %s74 = sshll.u32 [#allocation10], 4
      %s75 = int_to_ptr.vmem [resolvable:$true] %s74
      %80 = dma.hbm_to_vmem [thread:$0]  %s5, 2048, %s75, [#allocation9], 64, 64, 4
    $region25: #{tpu_custom_call.1} parent=1 // pred_fallthru
      _
    // Predicated region
    $region26: #{tpu_custom_call.1} parent=1 // pred_check
      _
    $region27: #{tpu_custom_call.1} parent=1 // pred_check_branch
      %82 = sbr.rel (0) target = $region29
    $region28: #{tpu_custom_call.1} parent=1 // pred_region
      _
    $region29: #{tpu_custom_call.1} parent=1 // pred_fallthru
      _
    // Predicated region
    $region30: #{tpu_custom_call.1} parent=1 // pred_check
      _
    $region31: #{tpu_custom_call.1} parent=1 // pred_check_branch
      %84 = sbr.rel (0) target = $region33
    $region32: #{tpu_custom_call.1} parent=1 // pred_region
      %s86 = ssub.s32 1024, 1024
      %87 = vsyncadd [#allocation12], %s86
      %s88 = sshll.u32 [#allocation11], 4
      %s89 = int_to_ptr.vmem [resolvable:$true] %s88
      %94 = dma.hbm_to_vmem [thread:$0]  %s7, 1024, %s89, [#allocation12], 64, 64, 4
    $region33: #{tpu_custom_call.1} parent=1 // pred_fallthru
      _
    // Predicated region
    $region34: #{tpu_custom_call.1} parent=1 // pred_check
      _
    $region35: #{tpu_custom_call.1} parent=1 // pred_check_branch
      %96 = sbr.rel (0) target = $region37
    $region36: #{tpu_custom_call.1} parent=1 // pred_region
      _
    $region37: #{tpu_custom_call.1} parent=1 // pred_fallthru
      _
    // Predicated region
    $region38: #{tpu_custom_call.1} parent=1 // pred_check
      _
    $region39: #{tpu_custom_call.1} parent=1 // pred_check_branch
      %98 = sbr.rel (0) target = $region41
    $region40: #{tpu_custom_call.1} parent=1 // pred_region
      %99 = dma.done [#allocation3], 256
    $region41: #{tpu_custom_call.1} parent=1 // pred_fallthru
      _
    // Predicated region
    $region42: #{tpu_custom_call.1} parent=1 // pred_check
      _
    $region43: #{tpu_custom_call.1} parent=1 // pred_check_branch
      %101 = sbr.rel (0) target = $region45
    $region44: #{tpu_custom_call.1} parent=1 // pred_region
      %102 = dma.done [#allocation6], 128
    $region45: #{tpu_custom_call.1} parent=1 // pred_fallthru
      _
    // Predicated region
    $region46: #{tpu_custom_call.1} parent=1 // pred_check
      _
    $region47: #{tpu_custom_call.1} parent=1 // pred_check_branch
      %104 = sbr.rel (0) target = $region49
    $region48: #{tpu_custom_call.1} parent=1 // pred_region
      %105 = dma.done [#allocation6], 512
    $region49: #{tpu_custom_call.1} parent=1 // pred_fallthru
      _
    // Predicated region
    $region50: #{tpu_custom_call.1} parent=1 // pred_check
      _
    $region51: #{tpu_custom_call.1} parent=1 // pred_check_branch
      %107 = sbr.rel (0) target = $region53
    $region52: #{tpu_custom_call.1} parent=1 // pred_region
      %108 = dma.done [#allocation9], 2048
    $region53: #{tpu_custom_call.1} parent=1 // pred_fallthru
      _
    // Predicated region
    $region54: #{tpu_custom_call.1} parent=1 // pred_check
      _
    $region55: #{tpu_custom_call.1} parent=1 // pred_check_branch
      %110 = sbr.rel (0) target = $region57
    $region56: #{tpu_custom_call.1} parent=1 // pred_region
      %111 = dma.done [#allocation9], 2048
    $region57: #{tpu_custom_call.1} parent=1 // pred_fallthru
      _
    // Predicated region
    $region58: #{tpu_custom_call.1} parent=1 // pred_check
      _
    $region59: #{tpu_custom_call.1} parent=1 // pred_check_branch
      %113 = sbr.rel (0) target = $region61
    $region60: #{tpu_custom_call.1} parent=1 // pred_region
      %114 = dma.done [#allocation12], 1024
    $region61: #{tpu_custom_call.1} parent=1 // pred_fallthru
      _
    %v116 = vld [vmem:[#allocation7] sm:$0xf]
    %v117 = vld [vmem:[#allocation7 + $0x4] sm:$0xf]
    %v118 = vld [vmem:[#allocation7 + $0x8] sm:$0xf]
    %v119 = vld [vmem:[#allocation7 + $0xc] sm:$0xf]
    %v120 = vld [vmem:[#allocation7 + $0x10] sm:$0xf]
    %v121 = vld [vmem:[#allocation7 + $0x14] sm:$0xf]
    %v122 = vld [vmem:[#allocation7 + $0x18] sm:$0xf]
    %v123 = vld [vmem:[#allocation7 + $0x1c] sm:$0xf]
    %v124 = vld [vmem:[#allocation2] sm:$0xf]
    %v125 = vld [vmem:[#allocation2 + $0x4] sm:$0xf]
    %v126 = vld [vmem:[#allocation2 + $0x8] sm:$0xf]
    %v127 = vld [vmem:[#allocation2 + $0xc] sm:$0xf]
    %v132 = vunpack.c.l.b16 %v124
    %v133 = vunpack.c.l.b16 %v125
    %v134 = vunpack.c.l.b16 %v126
    %v135 = vunpack.c.l.b16 %v127
    %v136 = vpack.c.b16 %v133, %v132
    %v137 = vpack.c.b16 %v135, %v134
    %v146 = vunpack.c.l.b16 %v116
    %v147 = vunpack.c.l.b16 %v117
    %v148 = vunpack.c.l.b16 %v118
    %v149 = vunpack.c.l.b16 %v119
    %v150 = vunpack.c.l.b16 %v120
    %v151 = vunpack.c.l.b16 %v121
    %v152 = vunpack.c.l.b16 %v122
    %v153 = vunpack.c.l.b16 %v123
    %v154 = vpack.c.b16 %v147, %v146
    %v155 = vpack.c.b16 %v149, %v148
    %v156 = vpack.c.b16 %v151, %v150
    %v157 = vpack.c.b16 %v153, %v152
    %vm162 = vcmask 523264
    %v164 = vsel %vm162, %v136, 0
    %v167 = vsel %vm162, %v137, 0
    %169 = vmatprep.subr.bf16.mxu0 0
    %170 = vmatpush1.bf16.msra.mxu0 %v154
    %171 = vmatprep.subr.bf16.mxu0 0
    %172 = vmatpush1.bf16.msra.mxu0 %v155
    %173 = vmatprep.subr.bf16.mxu0 0
    %174 = vmatpush1.bf16.msra.mxu0 %v156
    %175 = vmatprep.subr.bf16.mxu0 0
    %176 = vmatpush1.bf16.msra.mxu0 %v157
    %177 = vmatprep.subr.bf16.mxu0 0
    %178 = vmatpush1.bf16.msra.mxu0 0
    %179 = vmatprep.subr.bf16.mxu0 0
    %180 = vmatpush1.bf16.msra.mxu0 0
    %181 = vmatprep.subr.bf16.mxu0 0
    %182 = vmatpush1.bf16.msra.mxu0 0
    %183 = vmatprep.subr.bf16.mxu0 0
    %184 = vmatpush1.bf16.msra.mxu0 0
    %185 = vmatprep.subr.bf16.mxu0 0
    %186 = vmatpush1.bf16.msra.mxu0 0
    %187 = vmatprep.subr.bf16.mxu0 0
    %188 = vmatpush1.bf16.msra.mxu0 0
    %189 = vmatprep.subr.bf16.mxu0 0
    %190 = vmatpush1.bf16.msra.mxu0 0
    %191 = vmatprep.subr.bf16.mxu0 0
    %192 = vmatpush1.bf16.msra.mxu0 0
    %193 = vmatprep.subr.bf16.mxu0 0
    %194 = vmatpush1.bf16.msra.mxu0 0
    %195 = vmatprep.subr.bf16.mxu0 0
    %196 = vmatpush1.bf16.msra.mxu0 0
    %197 = vmatprep.subr.bf16.mxu0 0
    %198 = vmatpush1.bf16.msra.mxu0 0
    %199 = vmatprep.subr.bf16.mxu0 0
    %200 = vmatpush1.bf16.msra.mxu0 0
    %201 = vmatprep.mubr.bf16.mxu0 0
    %202 = vmatmul.mubr.bf16.gmra.mrb[0].mxu0 %v164
    %v203 = vpop.f32.mrb[0].mxu0
    %v204 = vadd.f32 0.0, %v203
    %v205 = vpop.f32.mrb[0].mxu0
    %v206 = vpop.f32.mrb[0].mxu0
    %v207 = vadd.f32 0.0, %v206
    %v208 = vpop.f32.mrb[0].mxu0
    %209 = vmatprep.mubr.bf16.mxu0 0
    %210 = vmatmul.mubr.bf16.gmra.mrb[0].mxu0 %v167
    %v211 = vpop.f32.mrb[0].mxu0
    %v212 = vadd.f32 0.0, %v211
    %v213 = vpop.f32.mrb[0].mxu0
    %v214 = vpop.f32.mrb[0].mxu0
    %v215 = vadd.f32 0.0, %v214
    %v216 = vpop.f32.mrb[0].mxu0
    %217 = vdwg.mxu0
    %v218 = vpack.c.bf16 %v207, %v204
    %v219 = vpack.c.bf16 %v215, %v212
    %v220 = vld [vmem:[#allocation8] sm:$0xf]
    %v221 = vld [vmem:[#allocation8 + $0x4] sm:$0xf]
    %v222 = vld [vmem:[#allocation8 + $0x8] sm:$0xf]
    %v223 = vld [vmem:[#allocation8 + $0xc] sm:$0xf]
    %v224 = vld [vmem:[#allocation8 + $0x10] sm:$0xf]
    %v225 = vld [vmem:[#allocation8 + $0x14] sm:$0xf]
    %v226 = vld [vmem:[#allocation8 + $0x18] sm:$0xf]
    %v227 = vld [vmem:[#allocation8 + $0x1c] sm:$0xf]
    %v228 = vld [vmem:[#allocation8 + $0x20] sm:$0xf]
    %v229 = vld [vmem:[#allocation8 + $0x24] sm:$0xf]
    %v230 = vld [vmem:[#allocation8 + $0x28] sm:$0xf]
    %v231 = vld [vmem:[#allocation8 + $0x2c] sm:$0xf]
    %v232 = vld [vmem:[#allocation8 + $0x30] sm:$0xf]
    %v233 = vld [vmem:[#allocation8 + $0x34] sm:$0xf]
    %v234 = vld [vmem:[#allocation8 + $0x38] sm:$0xf]
    %v235 = vld [vmem:[#allocation8 + $0x3c] sm:$0xf]
    %v236 = vld [vmem:[#allocation8 + $0x40] sm:$0xf]
    %v237 = vld [vmem:[#allocation8 + $0x44] sm:$0xf]
    %v238 = vld [vmem:[#allocation8 + $0x48] sm:$0xf]
    %v239 = vld [vmem:[#allocation8 + $0x4c] sm:$0xf]
    %v240 = vld [vmem:[#allocation8 + $0x50] sm:$0xf]
    %v241 = vld [vmem:[#allocation8 + $0x54] sm:$0xf]
    %v242 = vld [vmem:[#allocation8 + $0x58] sm:$0xf]
    %v243 = vld [vmem:[#allocation8 + $0x5c] sm:$0xf]
    %v244 = vld [vmem:[#allocation8 + $0x60] sm:$0xf]
    %v245 = vld [vmem:[#allocation8 + $0x64] sm:$0xf]
    %v246 = vld [vmem:[#allocation8 + $0x68] sm:$0xf]
    %v247 = vld [vmem:[#allocation8 + $0x6c] sm:$0xf]
    %v248 = vld [vmem:[#allocation8 + $0x70] sm:$0xf]
    %v249 = vld [vmem:[#allocation8 + $0x74] sm:$0xf]
    %v250 = vld [vmem:[#allocation8 + $0x78] sm:$0xf]
    %v251 = vld [vmem:[#allocation8 + $0x7c] sm:$0xf]
    %v252 = vld [vmem:[%s4] sm:$0x1]
    %v254 = vlaneseq
    %v255 = vshrl.u32 %v254, 7
    %v256 = vsub.s32 0, %v255
    %v257 = vrot.slane %v252, %v256
    %v291 = vunpack.c.l.b16 %v220
    %v292 = vunpack.c.l.b16 %v221
    %v293 = vunpack.c.l.b16 %v222
    %v294 = vunpack.c.l.b16 %v223
    %v295 = vunpack.c.l.b16 %v224
    %v296 = vunpack.c.l.b16 %v225
    %v297 = vunpack.c.l.b16 %v226
    %v298 = vunpack.c.l.b16 %v227
    %v299 = vunpack.c.l.b16 %v228
    %v300 = vunpack.c.l.b16 %v229
    %v301 = vunpack.c.l.b16 %v230
    %v302 = vunpack.c.l.b16 %v231
    %v303 = vunpack.c.l.b16 %v232
    %v304 = vunpack.c.l.b16 %v233
    %v305 = vunpack.c.l.b16 %v234
    %v306 = vunpack.c.l.b16 %v235
    %v307 = vunpack.c.l.b16 %v236
    %v308 = vunpack.c.l.b16 %v237
    %v309 = vunpack.c.l.b16 %v238
    %v310 = vunpack.c.l.b16 %v239
    %v311 = vunpack.c.l.b16 %v240
    %v312 = vunpack.c.l.b16 %v241
    %v313 = vunpack.c.l.b16 %v242
    %v314 = vunpack.c.l.b16 %v243
    %v315 = vunpack.c.l.b16 %v244
    %v316 = vunpack.c.l.b16 %v245
    %v317 = vunpack.c.l.b16 %v246
    %v318 = vunpack.c.l.b16 %v247
    %v319 = vunpack.c.l.b16 %v248
    %v320 = vunpack.c.l.b16 %v249
    %v321 = vunpack.c.l.b16 %v250
    %v322 = vunpack.c.l.b16 %v251
    %v323 = vpack.c.b16 %v292, %v291
    %v324 = vpack.c.b16 %v294, %v293
    %v325 = vpack.c.b16 %v296, %v295
    %v326 = vpack.c.b16 %v298, %v297
    %v327 = vpack.c.b16 %v300, %v299
    %v328 = vpack.c.b16 %v302, %v301
    %v329 = vpack.c.b16 %v304, %v303
    %v330 = vpack.c.b16 %v306, %v305
    %v331 = vpack.c.b16 %v308, %v307
    %v332 = vpack.c.b16 %v310, %v309
    %v333 = vpack.c.b16 %v312, %v311
    %v334 = vpack.c.b16 %v314, %v313
    %v335 = vpack.c.b16 %v316, %v315
    %v336 = vpack.c.b16 %v318, %v317
    %v337 = vpack.c.b16 %v320, %v319
    %v338 = vpack.c.b16 %v322, %v321
    %355 = vmatprep.subr.bf16.mxu0 0
    %356 = vmatpush1.bf16.msra.mxu0 %v323
    %357 = vmatprep.subr.bf16.mxu0 0
    %358 = vmatpush1.bf16.msra.mxu0 %v324
    %359 = vmatprep.subr.bf16.mxu0 0
    %360 = vmatpush1.bf16.msra.mxu0 %v325
    %361 = vmatprep.subr.bf16.mxu0 0
    %362 = vmatpush1.bf16.msra.mxu0 %v326
    %363 = vmatprep.subr.bf16.mxu0 0
    %364 = vmatpush1.bf16.msra.mxu0 %v327
    %365 = vmatprep.subr.bf16.mxu0 0
    %366 = vmatpush1.bf16.msra.mxu0 %v328
    %367 = vmatprep.subr.bf16.mxu0 0
    %368 = vmatpush1.bf16.msra.mxu0 %v329
    %369 = vmatprep.subr.bf16.mxu0 0
    %370 = vmatpush1.bf16.msra.mxu0 %v330
    %371 = vmatprep.subr.bf16.mxu0 0
    %372 = vmatpush1.bf16.msra.mxu0 %v331
    %373 = vmatprep.subr.bf16.mxu0 0
    %374 = vmatpush1.bf16.msra.mxu0 %v332
    %375 = vmatprep.subr.bf16.mxu0 0
    %376 = vmatpush1.bf16.msra.mxu0 %v333
    %377 = vmatprep.subr.bf16.mxu0 0
    %378 = vmatpush1.bf16.msra.mxu0 %v334
    %379 = vmatprep.subr.bf16.mxu0 0
    %380 = vmatpush1.bf16.msra.mxu0 %v335
    %381 = vmatprep.subr.bf16.mxu0 0
    %382 = vmatpush1.bf16.msra.mxu0 %v336
    %383 = vmatprep.subr.bf16.mxu0 0
    %384 = vmatpush1.bf16.msra.mxu0 %v337
    %385 = vmatprep.subr.bf16.mxu0 0
    %386 = vmatpush1.bf16.msra.mxu0 %v338
    %387 = vmatprep.mubr.bf16.mxu0 %v154
    %388 = vmatmul.mubr.bf16.gmra.mrb[0].mxu0 %v218
    %v389 = vpop.f32.mrb[0].mxu0
    %v390 = vadd.f32 %v257, %v389
    %v391 = vpop.f32.mrb[0].mxu0
    %v392 = vpop.f32.mrb[0].mxu0
    %v393 = vadd.f32 %v257, %v392
    %v394 = vpop.f32.mrb[0].mxu0
    %395 = vmatprep.mubr.bf16.mxu0 %v155
    %396 = vmatmul.mubr.bf16.gmra.mrb[0].mxu0 %v219
    %v397 = vpop.f32.mrb[0].mxu0
    %v398 = vadd.f32 %v257, %v397
    %v399 = vpop.f32.mrb[0].mxu0
    %v400 = vpop.f32.mrb[0].mxu0
    %v401 = vadd.f32 %v257, %v400
    %v402 = vpop.f32.mrb[0].mxu0
    %403 = vdwg.mxu0
    %v404 = vmax.f32 %v390, 0.0
    %v405 = vmax.f32 %v393, 0.0
    %v406 = vmax.f32 %v398, 0.0
    %v407 = vmax.f32 %v401, 0.0
    %v408 = vpack.c.bf16 %v405, %v404
    %v409 = vpack.c.bf16 %v407, %v406
    %v410 = vld [vmem:[#allocation5] sm:$0xf]
    %v411 = vld [vmem:[#allocation5 + $0x4] sm:$0xf]
    %v414 = vunpack.c.l.b16 %v410
    %v415 = vunpack.c.l.b16 %v411
    %v416 = vpack.c.b16 %v415, %v414
    %vm417 = vcmask 261120
    %v419 = vsel %vm417, %v416, 0
    %421 = vmatprep.subr.bf16.mxu0 0
    %422 = vmatpush1.bf16.msra.mxu0 %v408
    %423 = vmatprep.subr.bf16.mxu0 0
    %424 = vmatpush1.bf16.msra.mxu0 %v409
    %425 = vmatprep.subr.bf16.mxu0 0
    %426 = vmatpush1.bf16.msra.mxu0 0
    %427 = vmatprep.subr.bf16.mxu0 0
    %428 = vmatpush1.bf16.msra.mxu0 0
    %429 = vmatprep.subr.bf16.mxu0 0
    %430 = vmatpush1.bf16.msra.mxu0 0
    %431 = vmatprep.subr.bf16.mxu0 0
    %432 = vmatpush1.bf16.msra.mxu0 0
    %433 = vmatprep.subr.bf16.mxu0 0
    %434 = vmatpush1.bf16.msra.mxu0 0
    %435 = vmatprep.subr.bf16.mxu0 0
    %436 = vmatpush1.bf16.msra.mxu0 0
    %437 = vmatprep.subr.bf16.mxu0 0
    %438 = vmatpush1.bf16.msra.mxu0 0
    %439 = vmatprep.subr.bf16.mxu0 0
    %440 = vmatpush1.bf16.msra.mxu0 0
    %441 = vmatprep.subr.bf16.mxu0 0
    %442 = vmatpush1.bf16.msra.mxu0 0
    %443 = vmatprep.subr.bf16.mxu0 0
    %444 = vmatpush1.bf16.msra.mxu0 0
    %445 = vmatprep.subr.bf16.mxu0 0
    %446 = vmatpush1.bf16.msra.mxu0 0
    %447 = vmatprep.subr.bf16.mxu0 0
    %448 = vmatpush1.bf16.msra.mxu0 0
    %449 = vmatprep.subr.bf16.mxu0 0
    %450 = vmatpush1.bf16.msra.mxu0 0
    %451 = vmatprep.subr.bf16.mxu0 0
    %452 = vmatpush1.bf16.msra.mxu0 0
    %453 = vmatprep.mubr.bf16.mxu0 0
    %454 = vmatmul.mubr.bf16.gmra.mrb[0].mxu0 %v419
    %v455 = vpop.f32.mrb[0].mxu0
    %v456 = vadd.f32 0.0, %v455
    %v457 = vpop.f32.mrb[0].mxu0
    %v458 = vpop.f32.mrb[0].mxu0
    %v459 = vadd.f32 0.0, %v458
    %v460 = vpop.f32.mrb[0].mxu0
    %461 = vdwg.mxu0
    %v462 = vpack.c.bf16 %v459, %v456
    %v463 = vld [vmem:[#allocation10] sm:$0xf]
    %v464 = vld [vmem:[#allocation10 + $0x4] sm:$0xf]
    %v465 = vld [vmem:[#allocation10 + $0x8] sm:$0xf]
    %v466 = vld [vmem:[#allocation10 + $0xc] sm:$0xf]
    %v467 = vld [vmem:[#allocation10 + $0x10] sm:$0xf]
    %v468 = vld [vmem:[#allocation10 + $0x14] sm:$0xf]
    %v469 = vld [vmem:[#allocation10 + $0x18] sm:$0xf]
    %v470 = vld [vmem:[#allocation10 + $0x1c] sm:$0xf]
    %v471 = vld [vmem:[#allocation10 + $0x20] sm:$0xf]
    %v472 = vld [vmem:[#allocation10 + $0x24] sm:$0xf]
    %v473 = vld [vmem:[#allocation10 + $0x28] sm:$0xf]
    %v474 = vld [vmem:[#allocation10 + $0x2c] sm:$0xf]
    %v475 = vld [vmem:[#allocation10 + $0x30] sm:$0xf]
    %v476 = vld [vmem:[#allocation10 + $0x34] sm:$0xf]
    %v477 = vld [vmem:[#allocation10 + $0x38] sm:$0xf]
    %v478 = vld [vmem:[#allocation10 + $0x3c] sm:$0xf]
    %v479 = vld [vmem:[#allocation10 + $0x40] sm:$0xf]
    %v480 = vld [vmem:[#allocation10 + $0x44] sm:$0xf]
    %v481 = vld [vmem:[#allocation10 + $0x48] sm:$0xf]
    %v482 = vld [vmem:[#allocation10 + $0x4c] sm:$0xf]
    %v483 = vld [vmem:[#allocation10 + $0x50] sm:$0xf]
    %v484 = vld [vmem:[#allocation10 + $0x54] sm:$0xf]
    %v485 = vld [vmem:[#allocation10 + $0x58] sm:$0xf]
    %v486 = vld [vmem:[#allocation10 + $0x5c] sm:$0xf]
    %v487 = vld [vmem:[#allocation10 + $0x60] sm:$0xf]
    %v488 = vld [vmem:[#allocation10 + $0x64] sm:$0xf]
    %v489 = vld [vmem:[#allocation10 + $0x68] sm:$0xf]
    %v490 = vld [vmem:[#allocation10 + $0x6c] sm:$0xf]
    %v491 = vld [vmem:[#allocation10 + $0x70] sm:$0xf]
    %v492 = vld [vmem:[#allocation10 + $0x74] sm:$0xf]
    %v493 = vld [vmem:[#allocation10 + $0x78] sm:$0xf]
    %v494 = vld [vmem:[#allocation10 + $0x7c] sm:$0xf]
    %v495 = vld [vmem:[%s6] sm:$0x1]
    %v497 = vlaneseq
    %v498 = vshrl.u32 %v497, 7
    %v499 = vsub.s32 0, %v498
    %v500 = vrot.slane %v495, %v499
    %v534 = vunpack.c.l.b16 %v463
    %v535 = vunpack.c.l.b16 %v464
    %v536 = vunpack.c.l.b16 %v465
    %v537 = vunpack.c.l.b16 %v466
    %v538 = vunpack.c.l.b16 %v467
    %v539 = vunpack.c.l.b16 %v468
    %v540 = vunpack.c.l.b16 %v469
    %v541 = vunpack.c.l.b16 %v470
    %v542 = vunpack.c.l.b16 %v471
    %v543 = vunpack.c.l.b16 %v472
    %v544 = vunpack.c.l.b16 %v473
    %v545 = vunpack.c.l.b16 %v474
    %v546 = vunpack.c.l.b16 %v475
    %v547 = vunpack.c.l.b16 %v476
    %v548 = vunpack.c.l.b16 %v477
    %v549 = vunpack.c.l.b16 %v478
    %v550 = vunpack.c.l.b16 %v479
    %v551 = vunpack.c.l.b16 %v480
    %v552 = vunpack.c.l.b16 %v481
    %v553 = vunpack.c.l.b16 %v482
    %v554 = vunpack.c.l.b16 %v483
    %v555 = vunpack.c.l.b16 %v484
    %v556 = vunpack.c.l.b16 %v485
    %v557 = vunpack.c.l.b16 %v486
    %v558 = vunpack.c.l.b16 %v487
    %v559 = vunpack.c.l.b16 %v488
    %v560 = vunpack.c.l.b16 %v489
    %v561 = vunpack.c.l.b16 %v490
    %v562 = vunpack.c.l.b16 %v491
    %v563 = vunpack.c.l.b16 %v492
    %v564 = vunpack.c.l.b16 %v493
    %v565 = vunpack.c.l.b16 %v494
    %v566 = vpack.c.b16 %v535, %v534
    %v567 = vpack.c.b16 %v537, %v536
    %v568 = vpack.c.b16 %v539, %v538
    %v569 = vpack.c.b16 %v541, %v540
    %v570 = vpack.c.b16 %v543, %v542
    %v571 = vpack.c.b16 %v545, %v544
    %v572 = vpack.c.b16 %v547, %v546
    %v573 = vpack.c.b16 %v549, %v548
    %v574 = vpack.c.b16 %v551, %v550
    %v575 = vpack.c.b16 %v553, %v552
    %v576 = vpack.c.b16 %v555, %v554
    %v577 = vpack.c.b16 %v557, %v556
    %v578 = vpack.c.b16 %v559, %v558
    %v579 = vpack.c.b16 %v561, %v560
    %v580 = vpack.c.b16 %v563, %v562
    %v581 = vpack.c.b16 %v565, %v564
    %598 = vmatprep.subr.bf16.mxu0 0
    %599 = vmatpush1.bf16.msra.mxu0 %v566
    %600 = vmatprep.subr.bf16.mxu0 0
    %601 = vmatpush1.bf16.msra.mxu0 %v567
    %602 = vmatprep.subr.bf16.mxu0 0
    %603 = vmatpush1.bf16.msra.mxu0 %v568
    %604 = vmatprep.subr.bf16.mxu0 0
    %605 = vmatpush1.bf16.msra.mxu0 %v569
    %606 = vmatprep.subr.bf16.mxu0 0
    %607 = vmatpush1.bf16.msra.mxu0 %v570
    %608 = vmatprep.subr.bf16.mxu0 0
    %609 = vmatpush1.bf16.msra.mxu0 %v571
    %610 = vmatprep.subr.bf16.mxu0 0
    %611 = vmatpush1.bf16.msra.mxu0 %v572
    %612 = vmatprep.subr.bf16.mxu0 0
    %613 = vmatpush1.bf16.msra.mxu0 %v573
    %614 = vmatprep.subr.bf16.mxu0 0
    %615 = vmatpush1.bf16.msra.mxu0 %v574
    %616 = vmatprep.subr.bf16.mxu0 0
    %617 = vmatpush1.bf16.msra.mxu0 %v575
    %618 = vmatprep.subr.bf16.mxu0 0
    %619 = vmatpush1.bf16.msra.mxu0 %v576
    %620 = vmatprep.subr.bf16.mxu0 0
    %621 = vmatpush1.bf16.msra.mxu0 %v577
    %622 = vmatprep.subr.bf16.mxu0 0
    %623 = vmatpush1.bf16.msra.mxu0 %v578
    %624 = vmatprep.subr.bf16.mxu0 0
    %625 = vmatpush1.bf16.msra.mxu0 %v579
    %626 = vmatprep.subr.bf16.mxu0 0
    %627 = vmatpush1.bf16.msra.mxu0 %v580
    %628 = vmatprep.subr.bf16.mxu0 0
    %629 = vmatpush1.bf16.msra.mxu0 %v581
    %630 = vmatprep.mubr.bf16.mxu0 %v408
    %631 = vmatmul.mubr.bf16.gmra.mrb[0].mxu0 %v462
    %v632 = vpop.f32.mrb[0].mxu0
    %v633 = vadd.f32 %v500, %v632
    %v634 = vpop.f32.mrb[0].mxu0
    %v635 = vpop.f32.mrb[0].mxu0
    %v636 = vadd.f32 %v500, %v635
    %v637 = vpop.f32.mrb[0].mxu0
    %638 = vdwg.mxu0
    %v639 = vpack.c.bf16 %v636, %v633
    %v640 = vld [vmem:[#allocation11] sm:$0xf]
    %v641 = vld [vmem:[#allocation11 + $0x4] sm:$0xf]
    %v642 = vld [vmem:[#allocation11 + $0x8] sm:$0xf]
    %v643 = vld [vmem:[#allocation11 + $0xc] sm:$0xf]
    %v644 = vld [vmem:[#allocation11 + $0x10] sm:$0xf]
    %v645 = vld [vmem:[#allocation11 + $0x14] sm:$0xf]
    %v646 = vld [vmem:[#allocation11 + $0x18] sm:$0xf]
    %v647 = vld [vmem:[#allocation11 + $0x1c] sm:$0xf]
    %v648 = vld [vmem:[#allocation11 + $0x20] sm:$0xf]
    %v649 = vld [vmem:[#allocation11 + $0x24] sm:$0xf]
    %v650 = vld [vmem:[#allocation11 + $0x28] sm:$0xf]
    %v651 = vld [vmem:[#allocation11 + $0x2c] sm:$0xf]
    %v652 = vld [vmem:[#allocation11 + $0x30] sm:$0xf]
    %v653 = vld [vmem:[#allocation11 + $0x34] sm:$0xf]
    %v654 = vld [vmem:[#allocation11 + $0x38] sm:$0xf]
    %v655 = vld [vmem:[#allocation11 + $0x3c] sm:$0xf]
    %v656 = vld [vmem:[%s8] sm:$0x1]
    %v658 = vlaneseq
    %v659 = vshrl.u32 %v658, 7
    %v660 = vsub.s32 0, %v659
    %v661 = vrot.slane %v656, %v660
    %v679 = vunpack.c.l.b16 %v640
    %v680 = vunpack.c.l.b16 %v641
    %v681 = vunpack.c.l.b16 %v642
    %v682 = vunpack.c.l.b16 %v643
    %v683 = vunpack.c.l.b16 %v644
    %v684 = vunpack.c.l.b16 %v645
    %v685 = vunpack.c.l.b16 %v646
    %v686 = vunpack.c.l.b16 %v647
    %v687 = vunpack.c.l.b16 %v648
    %v688 = vunpack.c.l.b16 %v649
    %v689 = vunpack.c.l.b16 %v650
    %v690 = vunpack.c.l.b16 %v651
    %v691 = vunpack.c.l.b16 %v652
    %v692 = vunpack.c.l.b16 %v653
    %v693 = vunpack.c.l.b16 %v654
    %v694 = vunpack.c.l.b16 %v655
    %v695 = vpack.c.b16 %v680, %v679
    %v696 = vpack.c.b16 %v682, %v681
    %v697 = vpack.c.b16 %v684, %v683
    %v698 = vpack.c.b16 %v686, %v685
    %v699 = vpack.c.b16 %v688, %v687
    %v700 = vpack.c.b16 %v690, %v689
    %v701 = vpack.c.b16 %v692, %v691
    %v702 = vpack.c.b16 %v694, %v693
    %711 = vmatprep.subr.bf16.mxu0 0
    %712 = vmatpush1.bf16.msra.mxu0 %v695
    %713 = vmatprep.subr.bf16.mxu0 0
    %714 = vmatpush1.bf16.msra.mxu0 %v696
    %715 = vmatprep.subr.bf16.mxu0 0
    %716 = vmatpush1.bf16.msra.mxu0 %v697
    %717 = vmatprep.subr.bf16.mxu0 0
    %718 = vmatpush1.bf16.msra.mxu0 %v698
    %719 = vmatprep.subr.bf16.mxu0 0
    %720 = vmatpush1.bf16.msra.mxu0 %v699
    %721 = vmatprep.subr.bf16.mxu0 0
    %722 = vmatpush1.bf16.msra.mxu0 %v700
    %723 = vmatprep.subr.bf16.mxu0 0
    %724 = vmatpush1.bf16.msra.mxu0 %v701
    %725 = vmatprep.subr.bf16.mxu0 0
    %726 = vmatpush1.bf16.msra.mxu0 %v702
    %727 = vmatprep.subr.bf16.mxu0 0
    %728 = vmatpush1.bf16.msra.mxu0 0
    %729 = vmatprep.subr.bf16.mxu0 0
    %730 = vmatpush1.bf16.msra.mxu0 0
    %731 = vmatprep.subr.bf16.mxu0 0
    %732 = vmatpush1.bf16.msra.mxu0 0
    %733 = vmatprep.subr.bf16.mxu0 0
    %734 = vmatpush1.bf16.msra.mxu0 0
    %735 = vmatprep.subr.bf16.mxu0 0
    %736 = vmatpush1.bf16.msra.mxu0 0
    %737 = vmatprep.subr.bf16.mxu0 0
    %738 = vmatpush1.bf16.msra.mxu0 0
    %739 = vmatprep.subr.bf16.mxu0 0
    %740 = vmatpush1.bf16.msra.mxu0 0
    %741 = vmatprep.subr.bf16.mxu0 0
    %742 = vmatpush1.bf16.msra.mxu0 0
    %743 = vmatprep.mubr.bf16.mxu0 0
    %744 = vmatmul.mubr.bf16.gmra.mrb[0].mxu0 %v639
    %v745 = vpop.f32.mrb[0].mxu0
    %v746 = vadd.f32 %v661, %v745
    %v747 = vpop.f32.mrb[0].mxu0
    %v748 = vpop.f32.mrb[0].mxu0
    %v749 = vadd.f32 %v661, %v748
    %v750 = vpop.f32.mrb[0].mxu0
    %751 = vdwg.mxu0
    %v752 = vmax.f32 %v746, 0.0
    %v753 = vmax.f32 %v749, 0.0
    %754 = vst [vmem:[#allocation13] sm:$0xff] %v752
    %755 = vst [vmem:[#allocation13 + $0x8] sm:$0xff] %v753
    // Predicated region
    $region62: #{tpu_custom_call.1} parent=1 // pred_check
      _
    $region63: #{tpu_custom_call.1} parent=1 // pred_check_branch
      %757 = sbr.rel (0) target = $region65
    $region64: #{tpu_custom_call.1} parent=1 // pred_region
      %s759 = ssub.s32 256, 256
      %760 = vsyncadd [#allocation4], %s759
      %s761 = sshll.u32 [#allocation13], 4
      %s762 = int_to_ptr.vmem [resolvable:$true] %s761
      %767 = dma.vmem_to_hbm [thread:$0]  %s762, 256, %s9, [#allocation4], 128, 128, 8
    $region65: #{tpu_custom_call.1} parent=1 // pred_fallthru
      _
    // Predicated region
    $region66: #{tpu_custom_call.1} parent=1 // pred_check
      _
    $region67: #{tpu_custom_call.1} parent=1 // pred_check_branch
      %769 = sbr.rel (0) target = $region69
    $region68: #{tpu_custom_call.1} parent=1 // pred_region
      %770 = dma.done [#allocation4], 256
    $region69: #{tpu_custom_call.1} parent=1 // pred_fallthru
      _
    %771 = vsyncpa [#allocation3], 1
    %772 = vsyncpa [#allocation6], 1
    %773 = vsyncpa [#allocation9], 1
    %774 = vsyncpa [#allocation12], 1
    %775 = vsyncpa [#allocation4], 1

</llo_original>
